<compile_context>
chip_gen: v6e
topology: v6e:2x2x1
jax: 0.10.0
libtpu: 0.0.40
codegen_flags: <defaults>
</compile_context>

<pallas_src>
import jax
import jax.numpy as jnp
from jax.experimental import pallas as pl
from jax.experimental.pallas import tpu as pltpu


def _critic_kernel(obs_ref, act_ref, w1o_ref, w1a_ref, b1_ref,
                   w2_ref, b2_ref, w3_ref, b3_ref, qall_ref):
    """Fused n_q MLPs on one batch tile: 3 wide matmuls + ReLUs, f32 accum."""
    h = (jnp.dot(obs_ref[...], w1o_ref[...], preferred_element_type=jnp.float32)
         + jnp.dot(act_ref[...], w1a_ref[...], preferred_element_type=jnp.float32)
         + b1_ref[...])
    h = jnp.maximum(h, 0.0)                                      # ReLU
    h = jnp.dot(h, w2_ref[...], preferred_element_type=jnp.float32) + b2_ref[...]
    h = jnp.maximum(h, 0.0)                                      # ReLU
    qall_ref[...] = (jnp.dot(h, w3_ref[...], preferred_element_type=jnp.float32)
                     + b3_ref[...])                              # (TB, n_q)


def continuous_critic_forward(obs, act, params, *, return_q_min=True,
                              use_target_net=False, batch_tile=1024):
    p = params["target"]["fused"] if use_target_net else params["online"]["fused"]
    obs = obs.astype(jnp.float32)
    act = act.astype(jnp.float32)
    B, d_obs = obs.shape
    d_act = act.shape[1]
    h_tot = p["w2"].shape[0]            # n_q * hidden
    n_q = p["w3"].shape[-1]

    # Batch tile: full batch when small (block == full dim satisfies the (8,128)
    # rule for any B); otherwise a multiple-of-8 tile so the auto-pipeline
    # overlaps the obs/act DMA of tile i+1 with the matmuls of tile i.
    tb = B if B <= batch_tile else batch_tile
    grid = (pl.cdiv(B, tb),)

    def batched(shape):
        return pl.BlockSpec(shape, lambda i: (i, 0))

    def resident(shape):
        # Constant block index -> loaded once, stays VMEM-resident across grid.
        return pl.BlockSpec(shape, lambda i: (0, 0))

    q_all = pl.pallas_call(
        _critic_kernel,
        out_shape=jax.ShapeDtypeStruct((B, n_q), jnp.float32),
        grid=grid,
        in_specs=[batched((tb, d_obs)),
                  batched((tb, d_act)),
                  resident((d_obs, h_tot)),
                  resident((d_act, h_tot)),
                  resident((1, h_tot)),
                  resident((h_tot, h_tot)),
                  resident((1, h_tot)),
                  resident((h_tot, n_q)),
                  resident((1, n_q))],
        out_specs=batched((tb, n_q)),
        compiler_params=pltpu.CompilerParams(
            dimension_semantics=("parallel",)),       # megacore on v7x
    )(obs, act, p["w1_obs"], p["w1_act"], p["b1"],
      p["w2"], p["b2"], p["w3"], p["b3"])

    if return_q_min:
        return jnp.min(q_all, axis=-1, keepdims=True)  # trivial 2-wide min
    return q_all


def _fuse_q_net_params(raw, observation_dim):
    """One-time fusion of per-Q-net Linear stacks into wide / block-diag mats."""
    w1, b1 = raw["w1"], raw["b1"]      # (n_q, D, H1), (n_q, 1, H1)
    w2, b2 = raw["w2"], raw["b2"]      # (n_q, H1, H2), (n_q, 1, H2)
    w3, b3 = raw["w3"], raw["b3"]      # (n_q, H2, 1), (n_q, 1, 1)
    n_q, d_in, h1 = w1.shape
    h2 = w2.shape[2]

    w1f = jnp.transpose(w1, (1, 0, 2)).reshape(d_in, n_q * h1)   # (D, n_q*H1)
    w1_obs = w1f[:observation_dim]                               # (D_obs, n_q*H1)
    w1_act = w1f[observation_dim:]                               # (D_act, n_q*H1)
    b1f = b1.reshape(1, n_q * h1)

    w2f = jnp.zeros((n_q * h1, n_q * h2), jnp.float32)           # block-diag
    w3f = jnp.zeros((n_q * h2, n_q), jnp.float32)                # block-diag
    for i in range(n_q):
        w2f = w2f.at[i * h1:(i + 1) * h1, i * h2:(i + 1) * h2].set(w2[i])
        w3f = w3f.at[i * h2:(i + 1) * h2, i].set(w3[i, :, 0])
    b2f = b2.reshape(1, n_q * h2)
    b3f = b3.reshape(1, n_q)
    return {"w1_obs": w1_obs, "w1_act": w1_act, "b1": b1f,
            "w2": w2f, "b2": b2f, "w3": w3f, "b3": b3f}


def init_continuous_critic_params(key, observation_dim, action_dim,
                                  hidden_dims=(256, 256), n_q_nets=2):
    """Deterministic init mimicking torch.nn.Linear (U(-1/sqrt(fan_in), +))."""
    d_in = observation_dim + action_dim
    h1, h2 = hidden_dims

    def linear(key, fan_in, fan_out, n):
        kw, kb = jax.random.split(key)
        bound = 1.0 / jnp.sqrt(float(fan_in))
        w = jax.random.uniform(kw, (n, fan_in, fan_out), jnp.float32,
                               -bound, bound)
        b = jax.random.uniform(kb, (n, 1, fan_out), jnp.float32, -bound, bound)
        return w, b

    k1, k2, k3 = jax.random.split(key, 3)
    w1, b1 = linear(k1, d_in, h1, n_q_nets)
    w2, b2 = linear(k2, h1, h2, n_q_nets)
    w3, b3 = linear(k3, h2, 1, n_q_nets)
    online_raw = {"w1": w1, "b1": b1, "w2": w2, "b2": b2, "w3": w3, "b3": b3}
    # utils.hard_update(target, online): target starts as an exact copy.
    target_raw = {k: v for k, v in online_raw.items()}
    online = {"raw": online_raw,
              "fused": _fuse_q_net_params(online_raw, observation_dim)}
    target = {"raw": target_raw,
              "fused": _fuse_q_net_params(target_raw, observation_dim)}
    # TODO(synk): soft_update (Polyak averaging of target params) is training
    # machinery, not part of the forward pass; not implemented as a kernel.
    return {"online": online, "target": target}


def _reference_forward(obs, act, params, return_q_min=True,
                       use_target_net=False):
    p = (params["target"] if use_target_net else params["online"])["raw"]
    x = jnp.concatenate([obs, act], axis=-1)
    qs = []
    for i in range(p["w1"].shape[0]):
        h = jnp.maximum(x @ p["w1"][i] + p["b1"][i], 0.0)
        h = jnp.maximum(h @ p["w2"][i] + p["b2"][i], 0.0)
        qs.append(h @ p["w3"][i] + p["b3"][i])
    q_all = jnp.concatenate(qs, axis=-1)
    return jnp.min(q_all, axis=-1, keepdims=True) if return_q_min else q_all


if __name__ == "__main__":
    key = jax.random.PRNGKey(0)
    k_obs, k_act, k_par = jax.random.split(key, 3)

    batch, obs_dim, act_dim = 8, 17, 7          # small, module-consistent shapes
    obs = jax.random.normal(k_obs, (batch, obs_dim), jnp.float32)
    act = jax.random.normal(k_act, (batch, act_dim), jnp.float32)
    params = init_continuous_critic_params(k_par, obs_dim, act_dim,
                                           hidden_dims=(256, 256), n_q_nets=2)

    # q_min path (default forward) and q_values path, online and target nets.
    q_min = continuous_critic_forward(obs, act, params, return_q_min=True)
    q_all = continuous_critic_forward(obs, act, params, return_q_min=False)
    q_min_t = continuous_critic_forward(obs, act, params, return_q_min=True,
                                        use_target_net=True)
    jax.block_until_ready((q_min, q_all, q_min_t))

    assert q_min.shape == (batch, 1)
    assert q_all.shape == (batch, 2)

    ref_min = _reference_forward(obs, act, params, return_q_min=True)
    ref_all = _reference_forward(obs, act, params, return_q_min=False)
    assert jnp.allclose(q_min, ref_min, atol=1e-4, rtol=1e-4)
    assert jnp.allclose(q_all, ref_all, atol=1e-4, rtol=1e-4)
    assert jnp.allclose(q_min_t, ref_min, atol=1e-4, rtol=1e-4)  # hard_update copy

    print("KERNEL_OK")
</pallas_src>

<mosaic_0001>
module attributes {stable_mosaic.version = 11 : i64} {
  func.func @_critic_kernel(%arg0: i32, %arg1: memref<8x17xf32, #tpu.memory_space<vmem>>, %arg2: memref<8x7xf32, #tpu.memory_space<vmem>>, %arg3: memref<17x512xf32, #tpu.memory_space<vmem>>, %arg4: memref<7x512xf32, #tpu.memory_space<vmem>>, %arg5: memref<1x512xf32, #tpu.memory_space<vmem>>, %arg6: memref<512x512xf32, #tpu.memory_space<vmem>>, %arg7: memref<1x512xf32, #tpu.memory_space<vmem>>, %arg8: memref<512x2xf32, #tpu.memory_space<vmem>>, %arg9: memref<1x2xf32, #tpu.memory_space<vmem>>, %arg10: memref<8x2xf32, #tpu.memory_space<vmem>>) attributes {dimension_semantics = [#tpu.dimension_semantics<parallel>], iteration_bounds = array<i64: 1>, scalar_prefetch = 0 : i64, scratch_operands = 0 : i64, tpu.core_type = #tpu.core_type<tc>, window_params = [{transform_indices = @transform_0, window_bounds = array<i64: 8, 17>}, {transform_indices = @transform_1, window_bounds = array<i64: 8, 7>}, {pipeline_mode = #tpu.pipeline_mode<synchronous>, transform_indices = @transform_2, window_bounds = array<i64: 17, 512>}, {pipeline_mode = #tpu.pipeline_mode<synchronous>, transform_indices = @transform_3, window_bounds = array<i64: 7, 512>}, {pipeline_mode = #tpu.pipeline_mode<synchronous>, transform_indices = @transform_4, window_bounds = array<i64: 1, 512>}, {pipeline_mode = #tpu.pipeline_mode<synchronous>, transform_indices = @transform_5, window_bounds = array<i64: 512, 512>}, {pipeline_mode = #tpu.pipeline_mode<synchronous>, transform_indices = @transform_6, window_bounds = array<i64: 1, 512>}, {pipeline_mode = #tpu.pipeline_mode<synchronous>, transform_indices = @transform_7, window_bounds = array<i64: 512, 2>}, {pipeline_mode = #tpu.pipeline_mode<synchronous>, transform_indices = @transform_8, window_bounds = array<i64: 1, 2>}, {transform_indices = @transform_9, window_bounds = array<i64: 8, 2>}]} {
    %c0 = arith.constant 0 : index
    %c0_0 = arith.constant 0 : index
    %0 = vector.load %arg1[%c0, %c0_0] : memref<8x17xf32, #tpu.memory_space<vmem>>, vector<8x17xf32>
    %c0_1 = arith.constant 0 : index
    %c0_2 = arith.constant 0 : index
    %1 = vector.load %arg3[%c0_1, %c0_2] : memref<17x512xf32, #tpu.memory_space<vmem>>, vector<17x512xf32>
    %cst = arith.constant dense<0.000000e+00> : vector<8x512xf32>
    %2 = tpu.matmul %0, %1, %cst {dimension_numbers = #tpu.dot_dimension_numbers<[1], [0], [0], [1], [0, 0, 1, 1], [], []>} : vector<8x17xf32>, vector<17x512xf32>, vector<8x512xf32> -> vector<8x512xf32>
    %c0_3 = arith.constant 0 : index
    %c0_4 = arith.constant 0 : index
    %3 = vector.load %arg2[%c0_3, %c0_4] : memref<8x7xf32, #tpu.memory_space<vmem>>, vector<8x7xf32>
    %c0_5 = arith.constant 0 : index
    %c0_6 = arith.constant 0 : index
    %4 = vector.load %arg4[%c0_5, %c0_6] : memref<7x512xf32, #tpu.memory_space<vmem>>, vector<7x512xf32>
    %cst_7 = arith.constant dense<0.000000e+00> : vector<8x512xf32>
    %5 = tpu.matmul %3, %4, %cst_7 {dimension_numbers = #tpu.dot_dimension_numbers<[1], [0], [0], [1], [0, 0, 1, 1], [], []>} : vector<8x7xf32>, vector<7x512xf32>, vector<8x512xf32> -> vector<8x512xf32>
    %6 = arith.addf %2, %5 : vector<8x512xf32>
    %c0_8 = arith.constant 0 : index
    %c0_9 = arith.constant 0 : index
    %7 = vector.load %arg5[%c0_8, %c0_9] : memref<1x512xf32, #tpu.memory_space<vmem>>, vector<1x512xf32>
    %8 = vector.broadcast %7 : vector<1x512xf32> to vector<8x512xf32>
    %9 = arith.addf %6, %8 : vector<8x512xf32>
    %cst_10 = arith.constant 0.000000e+00 : f32
    %10 = vector.broadcast %cst_10 : f32 to vector<8x512xf32>
    %11 = arith.maximumf %9, %10 : vector<8x512xf32>
    %c0_11 = arith.constant 0 : index
    %c0_12 = arith.constant 0 : index
    %12 = vector.load %arg6[%c0_11, %c0_12] : memref<512x512xf32, #tpu.memory_space<vmem>>, vector<512x512xf32>
    %cst_13 = arith.constant dense<0.000000e+00> : vector<8x512xf32>
    %13 = tpu.matmul %11, %12, %cst_13 {dimension_numbers = #tpu.dot_dimension_numbers<[1], [0], [0], [1], [0, 0, 1, 1], [], []>} : vector<8x512xf32>, vector<512x512xf32>, vector<8x512xf32> -> vector<8x512xf32>
    %c0_14 = arith.constant 0 : index
    %c0_15 = arith.constant 0 : index
    %14 = vector.load %arg7[%c0_14, %c0_15] : memref<1x512xf32, #tpu.memory_space<vmem>>, vector<1x512xf32>
    %15 = vector.broadcast %14 : vector<1x512xf32> to vector<8x512xf32>
    %16 = arith.addf %13, %15 : vector<8x512xf32>
    %cst_16 = arith.constant 0.000000e+00 : f32
    %17 = vector.broadcast %cst_16 : f32 to vector<8x512xf32>
    %18 = arith.maximumf %16, %17 : vector<8x512xf32>
    %c0_17 = arith.constant 0 : index
    %c0_18 = arith.constant 0 : index
    %19 = vector.load %arg8[%c0_17, %c0_18] : memref<512x2xf32, #tpu.memory_space<vmem>>, vector<512x2xf32>
    %cst_19 = arith.constant dense<0.000000e+00> : vector<8x2xf32>
    %20 = tpu.matmul %18, %19, %cst_19 {dimension_numbers = #tpu.dot_dimension_numbers<[1], [0], [0], [1], [0, 0, 1, 1], [], []>} : vector<8x512xf32>, vector<512x2xf32>, vector<8x2xf32> -> vector<8x2xf32>
    %c0_20 = arith.constant 0 : index
    %c0_21 = arith.constant 0 : index
    %21 = vector.load %arg9[%c0_20, %c0_21] : memref<1x2xf32, #tpu.memory_space<vmem>>, vector<1x2xf32>
    %22 = vector.broadcast %21 : vector<1x2xf32> to vector<8x2xf32>
    %23 = arith.addf %20, %22 : vector<8x2xf32>
    %c0_22 = arith.constant 0 : index
    %c0_23 = arith.constant 0 : index
    %24 = vector.load %arg10[%c0_22, %c0_23] : memref<8x2xf32, #tpu.memory_space<vmem>>, vector<8x2xf32>
    tpu.vector_store %arg10[%c0_22, %c0_23], %23 {strides = array<i32>} : memref<8x2xf32, #tpu.memory_space<vmem>>, vector<8x2xf32>,
    return
  }
  func.func @transform_0(%arg0: i32) -> (i32, i32) {
    %c0_i32 = arith.constant 0 : i32
    %c0_i32_0 = arith.constant 0 : i32
    return %arg0, %c0_i32 : i32, i32
  }
  func.func @transform_1(%arg0: i32) -> (i32, i32) {
    %c0_i32 = arith.constant 0 : i32
    %c0_i32_0 = arith.constant 0 : i32
    return %arg0, %c0_i32 : i32, i32
  }
  func.func @transform_2(%arg0: i32) -> (i32, i32) {
    %c0_i32 = arith.constant 0 : i32
    %c0_i32_0 = arith.constant 0 : i32
    %c0_i32_1 = arith.constant 0 : i32
    return %c0_i32, %c0_i32_0 : i32, i32
  }
  func.func @transform_3(%arg0: i32) -> (i32, i32) {
    %c0_i32 = arith.constant 0 : i32
    %c0_i32_0 = arith.constant 0 : i32
    %c0_i32_1 = arith.constant 0 : i32
    return %c0_i32, %c0_i32_0 : i32, i32
  }
  func.func @transform_4(%arg0: i32) -> (i32, i32) {
    %c0_i32 = arith.constant 0 : i32
    %c0_i32_0 = arith.constant 0 : i32
    %c0_i32_1 = arith.constant 0 : i32
    return %c0_i32, %c0_i32_0 : i32, i32
  }
  func.func @transform_5(%arg0: i32) -> (i32, i32) {
    %c0_i32 = arith.constant 0 : i32
    %c0_i32_0 = arith.constant 0 : i32
    %c0_i32_1 = arith.constant 0 : i32
    return %c0_i32, %c0_i32_0 : i32, i32
  }
  func.func @transform_6(%arg0: i32) -> (i32, i32) {
    %c0_i32 = arith.constant 0 : i32
    %c0_i32_0 = arith.constant 0 : i32
    %c0_i32_1 = arith.constant 0 : i32
    return %c0_i32, %c0_i32_0 : i32, i32
  }
  func.func @transform_7(%arg0: i32) -> (i32, i32) {
    %c0_i32 = arith.constant 0 : i32
    %c0_i32_0 = arith.constant 0 : i32
    %c0_i32_1 = arith.constant 0 : i32
    return %c0_i32, %c0_i32_0 : i32, i32
  }
  func.func @transform_8(%arg0: i32) -> (i32, i32) {
    %c0_i32 = arith.constant 0 : i32
    %c0_i32_0 = arith.constant 0 : i32
    %c0_i32_1 = arith.constant 0 : i32
    return %c0_i32, %c0_i32_0 : i32, i32
  }
  func.func @transform_9(%arg0: i32) -> (i32, i32) {
    %c0_i32 = arith.constant 0 : i32
    %c0_i32_0 = arith.constant 0 : i32
    return %arg0, %c0_i32 : i32, i32
  }
}

</mosaic_0001>

<llo_original>
// kernel: tpu_custom_call.1
$region0: #{tpu_custom_call.1}
  #allocation0 [shape = 'u32[]', space=smem, size = 0x4, offset = 0x4, fixed_abs, tag = 'smem constant byte address 0x4 - core index']
  #allocation1 [shape = 'u32[144,128]{1,0:T(1,128)}', space=vmem, size = 0x12000, scoped, tag = 'internal scratch']
  %s0 = inlined_call_operand.vmem [shape: f32[8,17], index: 0, kind: input, shape index: {}]
  %s1 = inlined_call_operand.vmem [shape: f32[8,7], index: 1, kind: input, shape index: {}]
  %s2 = inlined_call_operand.vmem [shape: f32[17,512], index: 2, kind: input, shape index: {}]
  %s3 = inlined_call_operand.vmem [shape: f32[7,512], index: 3, kind: input, shape index: {}]
  %s4 = inlined_call_operand.vmem [shape: f32[1,512], index: 4, kind: input, shape index: {}]
  %s5 = inlined_call_operand.hbm [shape: f32[512,512], index: 5, kind: input, shape index: {}]
  %s6 = inlined_call_operand.vmem [shape: f32[1,512], index: 6, kind: input, shape index: {}]
  %s7 = inlined_call_operand.vmem [shape: f32[512,2], index: 7, kind: input, shape index: {}]
  %s8 = inlined_call_operand.vmem [shape: f32[1,2], index: 8, kind: input, shape index: {}]
  %s9 = inlined_call_operand.vmem [shape: f32[8,2], index: 9, kind: output, shape index: {}]
  %s10 = sld [smem:[#allocation0]]
  $region50: #{tpu_custom_call.1} parent=0
    _
  %s12 = ssub.s32 1, %s10
  %s13 = scalar_select 0, %s12, %s10
  $region1: #{tpu_custom_call.1} parent=0
    #allocation2 [shape = 'u8[1048576]{0}', space=vmem, size = 0x100000, scoped, tag = 'input window, operand 5, single buffered']
    #allocation3 [shape = 's32[1]{0}', space=sflag, size = 0x4, scoped, tag = 'scoped memory for tpu_custom_call.1']
    %14 = vsyncpa [#allocation3], 0
    // Predicated region
    $region2: #{tpu_custom_call.1} parent=1 // pred_check
      _
    $region3: #{tpu_custom_call.1} parent=1 // pred_check_branch
      %16 = sbr.rel (0) target = $region5
    $region4: #{tpu_custom_call.1} parent=1 // pred_region
      _
    $region5: #{tpu_custom_call.1} parent=1 // pred_fallthru
      _
    // Predicated region
    $region6: #{tpu_custom_call.1} parent=1 // pred_check
      _
    $region7: #{tpu_custom_call.1} parent=1 // pred_check_branch
      %18 = sbr.rel (0) target = $region9
    $region8: #{tpu_custom_call.1} parent=1 // pred_region
      _
    $region9: #{tpu_custom_call.1} parent=1 // pred_fallthru
      _
    // Predicated region
    $region10: #{tpu_custom_call.1} parent=1 // pred_check
      _
    $region11: #{tpu_custom_call.1} parent=1 // pred_check_branch
      %20 = sbr.rel (0) target = $region13
    $region12: #{tpu_custom_call.1} parent=1 // pred_region
      _
    $region13: #{tpu_custom_call.1} parent=1 // pred_fallthru
      _
    // Predicated region
    $region14: #{tpu_custom_call.1} parent=1 // pred_check
      _
    $region15: #{tpu_custom_call.1} parent=1 // pred_check_branch
      %22 = sbr.rel (0) target = $region17
    $region16: #{tpu_custom_call.1} parent=1 // pred_region
      _
    $region17: #{tpu_custom_call.1} parent=1 // pred_fallthru
      _
    // Predicated region
    $region18: #{tpu_custom_call.1} parent=1 // pred_check
      _
    $region19: #{tpu_custom_call.1} parent=1 // pred_check_branch
      %24 = sbr.rel (0) target = $region21
    $region20: #{tpu_custom_call.1} parent=1 // pred_region
      _
    $region21: #{tpu_custom_call.1} parent=1 // pred_fallthru
      _
    // Predicated region
    $region22: #{tpu_custom_call.1} parent=1 // pred_check
      _
    $region23: #{tpu_custom_call.1} parent=1 // pred_check_branch
      %26 = sbr.rel (0) target = $region25
    $region24: #{tpu_custom_call.1} parent=1 // pred_region
      %s28 = ssub.s32 32768, 32768
      %29 = vsyncadd [#allocation3], %s28
      %s30 = sshll.u32 [#allocation2], 4
      %s31 = int_to_ptr.vmem [resolvable:$true] %s30
      %36 = dma.hbm_to_vmem [thread:$0]  %s5, 32768, %s31, [#allocation3], 512, 512, 32
    $region25: #{tpu_custom_call.1} parent=1 // pred_fallthru
      _
    // Predicated region
    $region26: #{tpu_custom_call.1} parent=1 // pred_check
      _
    $region27: #{tpu_custom_call.1} parent=1 // pred_check_branch
      %38 = sbr.rel (0) target = $region29
    $region28: #{tpu_custom_call.1} parent=1 // pred_region
      _
    $region29: #{tpu_custom_call.1} parent=1 // pred_fallthru
      _
    // Predicated region
    $region30: #{tpu_custom_call.1} parent=1 // pred_check
      _
    $region31: #{tpu_custom_call.1} parent=1 // pred_check_branch
      %40 = sbr.rel (0) target = $region33
    $region32: #{tpu_custom_call.1} parent=1 // pred_region
      _
    $region33: #{tpu_custom_call.1} parent=1 // pred_fallthru
      _
    // Predicated region
    $region34: #{tpu_custom_call.1} parent=1 // pred_check
      _
    $region35: #{tpu_custom_call.1} parent=1 // pred_check_branch
      %42 = sbr.rel (0) target = $region37
    $region36: #{tpu_custom_call.1} parent=1 // pred_region
      _
    $region37: #{tpu_custom_call.1} parent=1 // pred_fallthru
      _
    // Predicated region
    $region38: #{tpu_custom_call.1} parent=1 // pred_check
      _
    $region39: #{tpu_custom_call.1} parent=1 // pred_check_branch
      %44 = sbr.rel (0) target = $region41
    $region40: #{tpu_custom_call.1} parent=1 // pred_region
      %45 = dma.done [#allocation3], 32768
    $region41: #{tpu_custom_call.1} parent=1 // pred_fallthru
      _
    %v46 = vld [vmem:[%s0] sm:$0xff]
    %v47 = vld [vmem:[%s2] sm:$0xff]
    %v48 = vld [vmem:[%s2 + $0x8] sm:$0xff]
    %v49 = vld [vmem:[%s2 + $0x10] sm:$0xff]
    %v50 = vld [vmem:[%s2 + $0x18] sm:$0xff]
    %v51 = vld [vmem:[%s2 + $0x20] sm:$0xff]
    %v52 = vld [vmem:[%s2 + $0x28] sm:$0xff]
    %v53 = vld [vmem:[%s2 + $0x30] sm:$0xff]
    %v54 = vld [vmem:[%s2 + $0x38] sm:$0xff]
    %v55 = vld [vmem:[%s2 + $0x40] sm:$0x1]
    %v56 = vld [vmem:[%s2 + $0x48] sm:$0x1]
    %v57 = vld [vmem:[%s2 + $0x50] sm:$0x1]
    %v58 = vld [vmem:[%s2 + $0x58] sm:$0x1]
    %v59 = vld [vmem:[%s1] sm:$0xff]
    %v60 = vld [vmem:[%s3] sm:$0x7f]
    %v61 = vld [vmem:[%s3 + $0x8] sm:$0x7f]
    %v62 = vld [vmem:[%s3 + $0x10] sm:$0x7f]
    %v63 = vld [vmem:[%s3 + $0x18] sm:$0x7f]
    %vm64 = vcmask 56320
    %v66 = vsel %vm64, %v59, 0
    %vm68 = vcmask 1046528
    %v70 = vsel %vm68, %v60, 0
    %v73 = vsel %vm68, %v61, 0
    %v76 = vsel %vm68, %v62, 0
    %v79 = vsel %vm68, %v63, 0
    %81 = vmatprep.subr.mxu0 0.0
    %82 = vmatpush1.msra.mxu0 0.0
    %83 = vmatprep.subr.mxu0 0.0
    %84 = vmatpush1.msra.mxu0 0.0
    %85 = vmatprep.subr.mxu0 0.0
    %86 = vmatpush1.msra.mxu0 0.0
    %87 = vmatprep.subr.mxu0 0.0
    %88 = vmatpush1.msra.mxu0 0.0
    %89 = vmatprep.subr.mxu0 0.0
    %90 = vmatpush1.msra.mxu0 0.0
    %91 = vmatprep.subr.mxu0 0.0
    %92 = vmatpush1.msra.mxu0 0.0
    %93 = vmatprep.subr.mxu0 0.0
    %94 = vmatpush1.msra.mxu0 0.0
    %95 = vmatprep.subr.mxu0 0.0
    %96 = vmatpush1.msra.mxu0 0.0
    %97 = vmatprep.subr.mxu0 0.0
    %98 = vmatpush1.msra.mxu0 0.0
    %99 = vmatprep.subr.mxu0 0.0
    %100 = vmatpush1.msra.mxu0 0.0
    %101 = vmatprep.subr.mxu0 0.0
    %102 = vmatpush1.msra.mxu0 0.0
    %103 = vmatprep.subr.mxu0 0.0
    %104 = vmatpush1.msra.mxu0 0.0
    %105 = vmatprep.subr.mxu0 0.0
    %106 = vmatpush1.msra.mxu0 0.0
    %107 = vmatprep.subr.mxu0 0.0
    %108 = vmatpush1.msra.mxu0 0.0
    %109 = vmatprep.subr.mxu0 0.0
    %110 = vmatpush1.msra.mxu0 0.0
    %111 = vmatprep.subr.mxu0 %v73
    %112 = vmatpush1.msra.mxu0 %v70
    %113 = vmatprep.subr.mxu0 0.0
    %114 = vmatpush2.msra.mxu0 0.0
    %115 = vmatprep.subr.mxu0 0.0
    %116 = vmatpush2.msra.mxu0 0.0
    %117 = vmatprep.subr.mxu0 0.0
    %118 = vmatpush2.msra.mxu0 0.0
    %119 = vmatprep.subr.mxu0 0.0
    %120 = vmatpush2.msra.mxu0 0.0
    %121 = vmatprep.subr.mxu0 0.0
    %122 = vmatpush2.msra.mxu0 0.0
    %123 = vmatprep.subr.mxu0 0.0
    %124 = vmatpush2.msra.mxu0 0.0
    %125 = vmatprep.subr.mxu0 0.0
    %126 = vmatpush2.msra.mxu0 0.0
    %127 = vmatprep.subr.mxu0 0.0
    %128 = vmatpush2.msra.mxu0 0.0
    %129 = vmatprep.subr.mxu0 0.0
    %130 = vmatpush2.msra.mxu0 0.0
    %131 = vmatprep.subr.mxu0 0.0
    %132 = vmatpush2.msra.mxu0 0.0
    %133 = vmatprep.subr.mxu0 0.0
    %134 = vmatpush2.msra.mxu0 0.0
    %135 = vmatprep.subr.mxu0 0.0
    %136 = vmatpush2.msra.mxu0 0.0
    %137 = vmatprep.subr.mxu0 0.0
    %138 = vmatpush2.msra.mxu0 0.0
    %139 = vmatprep.subr.mxu0 0.0
    %140 = vmatpush2.msra.mxu0 0.0
    %141 = vmatprep.subr.mxu0 0.0
    %142 = vmatpush2.msra.mxu0 0.0
    %143 = vmatprep.subr.mxu0 0.0
    %144 = vmatpush2.msra.mxu0 0.0
    %145 = vmatprep.mubr.f32.mxu0 0.0
    %146 = vmatmul.mubr.f32.gmra.mxu0 %v66
    %v147 = vpop.f32.mrf.mxu0
    %v148 = vadd.f32 0.0, %v147
    %v149 = vpop.f32.mrf.mxu0
    %v150 = vadd.f32 0.0, %v149
    %151 = vdwg.mxu0
    %152 = vmatprep.subr.mxu0 0.0
    %153 = vmatpush1.msra.mxu0 0.0
    %154 = vmatprep.subr.mxu0 0.0
    %155 = vmatpush1.msra.mxu0 0.0
    %156 = vmatprep.subr.mxu0 0.0
    %157 = vmatpush1.msra.mxu0 0.0
    %158 = vmatprep.subr.mxu0 0.0
    %159 = vmatpush1.msra.mxu0 0.0
    %160 = vmatprep.subr.mxu0 0.0
    %161 = vmatpush1.msra.mxu0 0.0
    %162 = vmatprep.subr.mxu0 0.0
    %163 = vmatpush1.msra.mxu0 0.0
    %164 = vmatprep.subr.mxu0 0.0
    %165 = vmatpush1.msra.mxu0 0.0
    %166 = vmatprep.subr.mxu0 0.0
    %167 = vmatpush1.msra.mxu0 0.0
    %168 = vmatprep.subr.mxu0 0.0
    %169 = vmatpush1.msra.mxu0 0.0
    %170 = vmatprep.subr.mxu0 0.0
    %171 = vmatpush1.msra.mxu0 0.0
    %172 = vmatprep.subr.mxu0 0.0
    %173 = vmatpush1.msra.mxu0 0.0
    %174 = vmatprep.subr.mxu0 0.0
    %175 = vmatpush1.msra.mxu0 0.0
    %176 = vmatprep.subr.mxu0 0.0
    %177 = vmatpush1.msra.mxu0 0.0
    %178 = vmatprep.subr.mxu0 0.0
    %179 = vmatpush1.msra.mxu0 0.0
    %180 = vmatprep.subr.mxu0 0.0
    %181 = vmatpush1.msra.mxu0 0.0
    %182 = vmatprep.subr.mxu0 %v79
    %183 = vmatpush1.msra.mxu0 %v76
    %184 = vmatprep.subr.mxu0 0.0
    %185 = vmatpush2.msra.mxu0 0.0
    %186 = vmatprep.subr.mxu0 0.0
    %187 = vmatpush2.msra.mxu0 0.0
    %188 = vmatprep.subr.mxu0 0.0
    %189 = vmatpush2.msra.mxu0 0.0
    %190 = vmatprep.subr.mxu0 0.0
    %191 = vmatpush2.msra.mxu0 0.0
    %192 = vmatprep.subr.mxu0 0.0
    %193 = vmatpush2.msra.mxu0 0.0
    %194 = vmatprep.subr.mxu0 0.0
    %195 = vmatpush2.msra.mxu0 0.0
    %196 = vmatprep.subr.mxu0 0.0
    %197 = vmatpush2.msra.mxu0 0.0
    %198 = vmatprep.subr.mxu0 0.0
    %199 = vmatpush2.msra.mxu0 0.0
    %200 = vmatprep.subr.mxu0 0.0
    %201 = vmatpush2.msra.mxu0 0.0
    %202 = vmatprep.subr.mxu0 0.0
    %203 = vmatpush2.msra.mxu0 0.0
    %204 = vmatprep.subr.mxu0 0.0
    %205 = vmatpush2.msra.mxu0 0.0
    %206 = vmatprep.subr.mxu0 0.0
    %207 = vmatpush2.msra.mxu0 0.0
    %208 = vmatprep.subr.mxu0 0.0
    %209 = vmatpush2.msra.mxu0 0.0
    %210 = vmatprep.subr.mxu0 0.0
    %211 = vmatpush2.msra.mxu0 0.0
    %212 = vmatprep.subr.mxu0 0.0
    %213 = vmatpush2.msra.mxu0 0.0
    %214 = vmatprep.subr.mxu0 0.0
    %215 = vmatpush2.msra.mxu0 0.0
    %216 = vmatprep.mubr.f32.mxu0 0.0
    %217 = vmatmul.mubr.f32.gmra.mxu0 %v66
    %v218 = vpop.f32.mrf.mxu0
    %v219 = vadd.f32 0.0, %v218
    %v220 = vpop.f32.mrf.mxu0
    %v221 = vadd.f32 0.0, %v220
    %222 = vdwg.mxu0
    %vm223 = vcmask 138240
    %v225 = vsel %vm223, %v46, 0
    %vm227 = vcmask 1040384
    %v229 = vsel %vm227, %v55, 0
    %v232 = vsel %vm227, %v56, 0
    %v235 = vsel %vm227, %v57, 0
    %v238 = vsel %vm227, %v58, 0
    %240 = vmatprep.subr.mxu0 0.0
    %241 = vmatpush1.msra.mxu0 0.0
    %242 = vmatprep.subr.mxu0 0.0
    %243 = vmatpush1.msra.mxu0 0.0
    %244 = vmatprep.subr.mxu0 0.0
    %245 = vmatpush1.msra.mxu0 0.0
    %246 = vmatprep.subr.mxu0 0.0
    %247 = vmatpush1.msra.mxu0 0.0
    %248 = vmatprep.subr.mxu0 0.0
    %249 = vmatpush1.msra.mxu0 0.0
    %250 = vmatprep.subr.mxu0 0.0
    %251 = vmatpush1.msra.mxu0 0.0
    %252 = vmatprep.subr.mxu0 0.0
    %253 = vmatpush1.msra.mxu0 0.0
    %254 = vmatprep.subr.mxu0 0.0
    %255 = vmatpush1.msra.mxu0 0.0
    %256 = vmatprep.subr.mxu0 0.0
    %257 = vmatpush1.msra.mxu0 0.0
    %258 = vmatprep.subr.mxu0 0.0
    %259 = vmatpush1.msra.mxu0 0.0
    %260 = vmatprep.subr.mxu0 0.0
    %261 = vmatpush1.msra.mxu0 0.0
    %262 = vmatprep.subr.mxu0 0.0
    %263 = vmatpush1.msra.mxu0 0.0
    %264 = vmatprep.subr.mxu0 0.0
    %265 = vmatpush1.msra.mxu0 0.0
    %266 = vmatprep.subr.mxu0 %v232
    %267 = vmatpush1.msra.mxu0 %v229
    %268 = vmatprep.subr.mxu0 %v52
    %269 = vmatpush1.msra.mxu0 %v51
    %270 = vmatprep.subr.mxu0 %v48
    %271 = vmatpush1.msra.mxu0 %v47
    %272 = vmatprep.subr.mxu0 0.0
    %273 = vmatpush2.msra.mxu0 0.0
    %274 = vmatprep.subr.mxu0 0.0
    %275 = vmatpush2.msra.mxu0 0.0
    %276 = vmatprep.subr.mxu0 0.0
    %277 = vmatpush2.msra.mxu0 0.0
    %278 = vmatprep.subr.mxu0 0.0
    %279 = vmatpush2.msra.mxu0 0.0
    %280 = vmatprep.subr.mxu0 0.0
    %281 = vmatpush2.msra.mxu0 0.0
    %282 = vmatprep.subr.mxu0 0.0
    %283 = vmatpush2.msra.mxu0 0.0
    %284 = vmatprep.subr.mxu0 0.0
    %285 = vmatpush2.msra.mxu0 0.0
    %286 = vmatprep.subr.mxu0 0.0
    %287 = vmatpush2.msra.mxu0 0.0
    %288 = vmatprep.subr.mxu0 0.0
    %289 = vmatpush2.msra.mxu0 0.0
    %290 = vmatprep.subr.mxu0 0.0
    %291 = vmatpush2.msra.mxu0 0.0
    %292 = vmatprep.subr.mxu0 0.0
    %293 = vmatpush2.msra.mxu0 0.0
    %294 = vmatprep.subr.mxu0 0.0
    %295 = vmatpush2.msra.mxu0 0.0
    %296 = vmatprep.subr.mxu0 0.0
    %297 = vmatpush2.msra.mxu0 0.0
    %298 = vmatprep.subr.mxu0 0.0
    %299 = vmatpush2.msra.mxu0 0.0
    %300 = vmatprep.subr.mxu0 0.0
    %301 = vmatpush2.msra.mxu0 0.0
    %302 = vmatprep.subr.mxu0 0.0
    %303 = vmatpush2.msra.mxu0 0.0
    %304 = vmatprep.mubr.f32.mxu0 0.0
    %305 = vmatmul.mubr.f32.gmra.mxu0 %v225
    %v306 = vpop.f32.mrf.mxu0
    %v307 = vadd.f32 %v148, %v306
    %v308 = vpop.f32.mrf.mxu0
    %v309 = vadd.f32 %v150, %v308
    %310 = vdwg.mxu0
    %311 = vmatprep.subr.mxu0 0.0
    %312 = vmatpush1.msra.mxu0 0.0
    %313 = vmatprep.subr.mxu0 0.0
    %314 = vmatpush1.msra.mxu0 0.0
    %315 = vmatprep.subr.mxu0 0.0
    %316 = vmatpush1.msra.mxu0 0.0
    %317 = vmatprep.subr.mxu0 0.0
    %318 = vmatpush1.msra.mxu0 0.0
    %319 = vmatprep.subr.mxu0 0.0
    %320 = vmatpush1.msra.mxu0 0.0
    %321 = vmatprep.subr.mxu0 0.0
    %322 = vmatpush1.msra.mxu0 0.0
    %323 = vmatprep.subr.mxu0 0.0
    %324 = vmatpush1.msra.mxu0 0.0
    %325 = vmatprep.subr.mxu0 0.0
    %326 = vmatpush1.msra.mxu0 0.0
    %327 = vmatprep.subr.mxu0 0.0
    %328 = vmatpush1.msra.mxu0 0.0
    %329 = vmatprep.subr.mxu0 0.0
    %330 = vmatpush1.msra.mxu0 0.0
    %331 = vmatprep.subr.mxu0 0.0
    %332 = vmatpush1.msra.mxu0 0.0
    %333 = vmatprep.subr.mxu0 0.0
    %334 = vmatpush1.msra.mxu0 0.0
    %335 = vmatprep.subr.mxu0 0.0
    %336 = vmatpush1.msra.mxu0 0.0
    %337 = vmatprep.subr.mxu0 %v238
    %338 = vmatpush1.msra.mxu0 %v235
    %339 = vmatprep.subr.mxu0 %v54
    %340 = vmatpush1.msra.mxu0 %v53
    %341 = vmatprep.subr.mxu0 %v50
    %342 = vmatpush1.msra.mxu0 %v49
    %343 = vmatprep.subr.mxu0 0.0
    %344 = vmatpush2.msra.mxu0 0.0
    %345 = vmatprep.subr.mxu0 0.0
    %346 = vmatpush2.msra.mxu0 0.0
    %347 = vmatprep.subr.mxu0 0.0
    %348 = vmatpush2.msra.mxu0 0.0
    %349 = vmatprep.subr.mxu0 0.0
    %350 = vmatpush2.msra.mxu0 0.0
    %351 = vmatprep.subr.mxu0 0.0
    %352 = vmatpush2.msra.mxu0 0.0
    %353 = vmatprep.subr.mxu0 0.0
    %354 = vmatpush2.msra.mxu0 0.0
    %355 = vmatprep.subr.mxu0 0.0
    %356 = vmatpush2.msra.mxu0 0.0
    %357 = vmatprep.subr.mxu0 0.0
    %358 = vmatpush2.msra.mxu0 0.0
    %359 = vmatprep.subr.mxu0 0.0
    %360 = vmatpush2.msra.mxu0 0.0
    %361 = vmatprep.subr.mxu0 0.0
    %362 = vmatpush2.msra.mxu0 0.0
    %363 = vmatprep.subr.mxu0 0.0
    %364 = vmatpush2.msra.mxu0 0.0
    %365 = vmatprep.subr.mxu0 0.0
    %366 = vmatpush2.msra.mxu0 0.0
    %367 = vmatprep.subr.mxu0 0.0
    %368 = vmatpush2.msra.mxu0 0.0
    %369 = vmatprep.subr.mxu0 0.0
    %370 = vmatpush2.msra.mxu0 0.0
    %371 = vmatprep.subr.mxu0 0.0
    %372 = vmatpush2.msra.mxu0 0.0
    %373 = vmatprep.subr.mxu0 0.0
    %374 = vmatpush2.msra.mxu0 0.0
    %375 = vmatprep.mubr.f32.mxu0 0.0
    %376 = vmatmul.mubr.f32.gmra.mxu0 %v225
    %v377 = vpop.f32.mrf.mxu0
    %v378 = vadd.f32 %v219, %v377
    %v379 = vpop.f32.mrf.mxu0
    %v380 = vadd.f32 %v221, %v379
    %381 = vdwg.mxu0
    %v382 = vld [vmem:[%s4] sm:$0xf]
    %v384 = vlaneseq
    %v385 = vshrl.u32 %v384, 7
    %v386 = vsub.s32 0, %v385
    %v387 = vrot.slane %v382, %v386
    %v388 = vlaneseq
    %v389 = vshrl.u32 %v388, 7
    %v390 = vsub.s32 1, %v389
    %v391 = vrot.slane %v382, %v390
    %v392 = vlaneseq
    %v393 = vshrl.u32 %v392, 7
    %v394 = vsub.s32 2, %v393
    %v395 = vrot.slane %v382, %v394
    %v396 = vlaneseq
    %v397 = vshrl.u32 %v396, 7
    %v398 = vsub.s32 3, %v397
    %v399 = vrot.slane %v382, %v398
    %v404 = vadd.f32 %v307, %v387
    %v405 = vadd.f32 %v309, %v391
    %v406 = vadd.f32 %v378, %v395
    %v407 = vadd.f32 %v380, %v399
    %v408 = vmax.f32 %v404, 0.0
    %v409 = vmax.f32 %v405, 0.0
    %v410 = vmax.f32 %v406, 0.0
    %v411 = vmax.f32 %v407, 0.0
    %v412 = vld [vmem:[#allocation2] sm:$0xff]
    %v413 = vld [vmem:[#allocation2 + $0x8] sm:$0xff]
    %v414 = vld [vmem:[#allocation2 + $0x10] sm:$0xff]
    %v415 = vld [vmem:[#allocation2 + $0x18] sm:$0xff]
    %v416 = vld [vmem:[#allocation2 + $0x20] sm:$0xff]
    %v417 = vld [vmem:[#allocation2 + $0x28] sm:$0xff]
    %v418 = vld [vmem:[#allocation2 + $0x30] sm:$0xff]
    %v419 = vld [vmem:[#allocation2 + $0x38] sm:$0xff]
    %v420 = vld [vmem:[#allocation2 + $0x40] sm:$0xff]
    %v421 = vld [vmem:[#allocation2 + $0x48] sm:$0xff]
    %v422 = vld [vmem:[#allocation2 + $0x50] sm:$0xff]
    %v423 = vld [vmem:[#allocation2 + $0x58] sm:$0xff]
    %v424 = vld [vmem:[#allocation2 + $0x60] sm:$0xff]
    %v425 = vld [vmem:[#allocation2 + $0x68] sm:$0xff]
    %v426 = vld [vmem:[#allocation2 + $0x70] sm:$0xff]
    %v427 = vld [vmem:[#allocation2 + $0x78] sm:$0xff]
    %v428 = vld [vmem:[#allocation2 + $0x80] sm:$0xff]
    %v429 = vld [vmem:[#allocation2 + $0x88] sm:$0xff]
    %v430 = vld [vmem:[#allocation2 + $0x90] sm:$0xff]
    %v431 = vld [vmem:[#allocation2 + $0x98] sm:$0xff]
    %v432 = vld [vmem:[#allocation2 + $0xa0] sm:$0xff]
    %v433 = vld [vmem:[#allocation2 + $0xa8] sm:$0xff]
    %v434 = vld [vmem:[#allocation2 + $0xb0] sm:$0xff]
    %v435 = vld [vmem:[#allocation2 + $0xb8] sm:$0xff]
    %v436 = vld [vmem:[#allocation2 + $0xc0] sm:$0xff]
    %v437 = vld [vmem:[#allocation2 + $0xc8] sm:$0xff]
    %v438 = vld [vmem:[#allocation2 + $0xd0] sm:$0xff]
    %v439 = vld [vmem:[#allocation2 + $0xd8] sm:$0xff]
    %v440 = vld [vmem:[#allocation2 + $0xe0] sm:$0xff]
    %v441 = vld [vmem:[#allocation2 + $0xe8] sm:$0xff]
    %v442 = vld [vmem:[#allocation2 + $0xf0] sm:$0xff]
    %v443 = vld [vmem:[#allocation2 + $0xf8] sm:$0xff]
    %v444 = vld [vmem:[#allocation2 + $0x100] sm:$0xff]
    %v445 = vld [vmem:[#allocation2 + $0x108] sm:$0xff]
    %v446 = vld [vmem:[#allocation2 + $0x110] sm:$0xff]
    %v447 = vld [vmem:[#allocation2 + $0x118] sm:$0xff]
    %v448 = vld [vmem:[#allocation2 + $0x120] sm:$0xff]
    %v449 = vld [vmem:[#allocation2 + $0x128] sm:$0xff]
    %v450 = vld [vmem:[#allocation2 + $0x130] sm:$0xff]
    %v451 = vld [vmem:[#allocation2 + $0x138] sm:$0xff]
    %v452 = vld [vmem:[#allocation2 + $0x140] sm:$0xff]
    %v453 = vld [vmem:[#allocation2 + $0x148] sm:$0xff]
    %v454 = vld [vmem:[#allocation2 + $0x150] sm:$0xff]
    %v455 = vld [vmem:[#allocation2 + $0x158] sm:$0xff]
    %v456 = vld [vmem:[#allocation2 + $0x160] sm:$0xff]
    %v457 = vld [vmem:[#allocation2 + $0x168] sm:$0xff]
    %v458 = vld [vmem:[#allocation2 + $0x170] sm:$0xff]
    %v459 = vld [vmem:[#allocation2 + $0x178] sm:$0xff]
    %v460 = vld [vmem:[#allocation2 + $0x180] sm:$0xff]
    %v461 = vld [vmem:[#allocation2 + $0x188] sm:$0xff]
    %v462 = vld [vmem:[#allocation2 + $0x190] sm:$0xff]
    %v463 = vld [vmem:[#allocation2 + $0x198] sm:$0xff]
    %v464 = vld [vmem:[#allocation2 + $0x1a0] sm:$0xff]
    %v465 = vld [vmem:[#allocation2 + $0x1a8] sm:$0xff]
    %v466 = vld [vmem:[#allocation2 + $0x1b0] sm:$0xff]
    %v467 = vld [vmem:[#allocation2 + $0x1b8] sm:$0xff]
    %v468 = vld [vmem:[#allocation2 + $0x1c0] sm:$0xff]
    %v469 = vld [vmem:[#allocation2 + $0x1c8] sm:$0xff]
    %v470 = vld [vmem:[#allocation2 + $0x1d0] sm:$0xff]
    %v471 = vld [vmem:[#allocation2 + $0x1d8] sm:$0xff]
    %v472 = vld [vmem:[#allocation2 + $0x1e0] sm:$0xff]
    %v473 = vld [vmem:[#allocation2 + $0x1e8] sm:$0xff]
    %v474 = vld [vmem:[#allocation2 + $0x1f0] sm:$0xff]
    %v475 = vld [vmem:[#allocation2 + $0x1f8] sm:$0xff]
    %v476 = vld [vmem:[#allocation2 + $0x200] sm:$0xff]
    %v477 = vld [vmem:[#allocation2 + $0x208] sm:$0xff]
    %v478 = vld [vmem:[#allocation2 + $0x210] sm:$0xff]
    %v479 = vld [vmem:[#allocation2 + $0x218] sm:$0xff]
    %v480 = vld [vmem:[#allocation2 + $0x220] sm:$0xff]
    %v481 = vld [vmem:[#allocation2 + $0x228] sm:$0xff]
    %v482 = vld [vmem:[#allocation2 + $0x230] sm:$0xff]
    %v483 = vld [vmem:[#allocation2 + $0x238] sm:$0xff]
    %v484 = vld [vmem:[#allocation2 + $0x240] sm:$0xff]
    %v485 = vld [vmem:[#allocation2 + $0x248] sm:$0xff]
    %v486 = vld [vmem:[#allocation2 + $0x250] sm:$0xff]
    %v487 = vld [vmem:[#allocation2 + $0x258] sm:$0xff]
    %v488 = vld [vmem:[#allocation2 + $0x260] sm:$0xff]
    %v489 = vld [vmem:[#allocation2 + $0x268] sm:$0xff]
    %v490 = vld [vmem:[#allocation2 + $0x270] sm:$0xff]
    %v491 = vld [vmem:[#allocation2 + $0x278] sm:$0xff]
    %v492 = vld [vmem:[#allocation2 + $0x280] sm:$0xff]
    %v493 = vld [vmem:[#allocation2 + $0x288] sm:$0xff]
    %v494 = vld [vmem:[#allocation2 + $0x290] sm:$0xff]
    %v495 = vld [vmem:[#allocation2 + $0x298] sm:$0xff]
    %v496 = vld [vmem:[#allocation2 + $0x2a0] sm:$0xff]
    %v497 = vld [vmem:[#allocation2 + $0x2a8] sm:$0xff]
    %v498 = vld [vmem:[#allocation2 + $0x2b0] sm:$0xff]
    %v499 = vld [vmem:[#allocation2 + $0x2b8] sm:$0xff]
    %v500 = vld [vmem:[#allocation2 + $0x2c0] sm:$0xff]
    %v501 = vld [vmem:[#allocation2 + $0x2c8] sm:$0xff]
    %v502 = vld [vmem:[#allocation2 + $0x2d0] sm:$0xff]
    %v503 = vld [vmem:[#allocation2 + $0x2d8] sm:$0xff]
    %v504 = vld [vmem:[#allocation2 + $0x2e0] sm:$0xff]
    %v505 = vld [vmem:[#allocation2 + $0x2e8] sm:$0xff]
    %v506 = vld [vmem:[#allocation2 + $0x2f0] sm:$0xff]
    %v507 = vld [vmem:[#allocation2 + $0x2f8] sm:$0xff]
    %v508 = vld [vmem:[#allocation2 + $0x300] sm:$0xff]
    %v509 = vld [vmem:[#allocation2 + $0x308] sm:$0xff]
    %v510 = vld [vmem:[#allocation2 + $0x310] sm:$0xff]
    %v511 = vld [vmem:[#allocation2 + $0x318] sm:$0xff]
    %v512 = vld [vmem:[#allocation2 + $0x320] sm:$0xff]
    %v513 = vld [vmem:[#allocation2 + $0x328] sm:$0xff]
    %v514 = vld [vmem:[#allocation2 + $0x330] sm:$0xff]
    %v515 = vld [vmem:[#allocation2 + $0x338] sm:$0xff]
    %v516 = vld [vmem:[#allocation2 + $0x340] sm:$0xff]
    %v517 = vld [vmem:[#allocation2 + $0x348] sm:$0xff]
    %v518 = vld [vmem:[#allocation2 + $0x350] sm:$0xff]
    %v519 = vld [vmem:[#allocation2 + $0x358] sm:$0xff]
    %v520 = vld [vmem:[#allocation2 + $0x360] sm:$0xff]
    %v521 = vld [vmem:[#allocation2 + $0x368] sm:$0xff]
    %v522 = vld [vmem:[#allocation2 + $0x370] sm:$0xff]
    %v523 = vld [vmem:[#allocation2 + $0x378] sm:$0xff]
    %v524 = vld [vmem:[#allocation2 + $0x380] sm:$0xff]
    %v525 = vld [vmem:[#allocation2 + $0x388] sm:$0xff]
    %v526 = vld [vmem:[#allocation2 + $0x390] sm:$0xff]
    %v527 = vld [vmem:[#allocation2 + $0x398] sm:$0xff]
    %v528 = vld [vmem:[#allocation2 + $0x3a0] sm:$0xff]
    %v529 = vld [vmem:[#allocation2 + $0x3a8] sm:$0xff]
    %v530 = vld [vmem:[#allocation2 + $0x3b0] sm:$0xff]
    %v531 = vld [vmem:[#allocation2 + $0x3b8] sm:$0xff]
    %v532 = vld [vmem:[#allocation2 + $0x3c0] sm:$0xff]
    %v533 = vld [vmem:[#allocation2 + $0x3c8] sm:$0xff]
    %v534 = vld [vmem:[#allocation2 + $0x3d0] sm:$0xff]
    %v535 = vld [vmem:[#allocation2 + $0x3d8] sm:$0xff]
    %v536 = vld [vmem:[#allocation2 + $0x3e0] sm:$0xff]
    %v537 = vld [vmem:[#allocation2 + $0x3e8] sm:$0xff]
    %v538 = vld [vmem:[#allocation2 + $0x3f0] sm:$0xff]
    %v539 = vld [vmem:[#allocation2 + $0x3f8] sm:$0xff]
    %v540 = vld [vmem:[#allocation2 + $0x400] sm:$0xff]
    %v541 = vld [vmem:[#allocation2 + $0x408] sm:$0xff]
    %v542 = vld [vmem:[#allocation2 + $0x410] sm:$0xff]
    %v543 = vld [vmem:[#allocation2 + $0x418] sm:$0xff]
    %v544 = vld [vmem:[#allocation2 + $0x420] sm:$0xff]
    %v545 = vld [vmem:[#allocation2 + $0x428] sm:$0xff]
    %v546 = vld [vmem:[#allocation2 + $0x430] sm:$0xff]
    %v547 = vld [vmem:[#allocation2 + $0x438] sm:$0xff]
    %v548 = vld [vmem:[#allocation2 + $0x440] sm:$0xff]
    %v549 = vld [vmem:[#allocation2 + $0x448] sm:$0xff]
    %v550 = vld [vmem:[#allocation2 + $0x450] sm:$0xff]
    %v551 = vld [vmem:[#allocation2 + $0x458] sm:$0xff]
    %v552 = vld [vmem:[#allocation2 + $0x460] sm:$0xff]
    %v553 = vld [vmem:[#allocation2 + $0x468] sm:$0xff]
    %v554 = vld [vmem:[#allocation2 + $0x470] sm:$0xff]
    %v555 = vld [vmem:[#allocation2 + $0x478] sm:$0xff]
    %v556 = vld [vmem:[#allocation2 + $0x480] sm:$0xff]
    %v557 = vld [vmem:[#allocation2 + $0x488] sm:$0xff]
    %v558 = vld [vmem:[#allocation2 + $0x490] sm:$0xff]
    %v559 = vld [vmem:[#allocation2 + $0x498] sm:$0xff]
    %v560 = vld [vmem:[#allocation2 + $0x4a0] sm:$0xff]
    %v561 = vld [vmem:[#allocation2 + $0x4a8] sm:$0xff]
    %v562 = vld [vmem:[#allocation2 + $0x4b0] sm:$0xff]
    %v563 = vld [vmem:[#allocation2 + $0x4b8] sm:$0xff]
    %v564 = vld [vmem:[#allocation2 + $0x4c0] sm:$0xff]
    %v565 = vld [vmem:[#allocation2 + $0x4c8] sm:$0xff]
    %v566 = vld [vmem:[#allocation2 + $0x4d0] sm:$0xff]
    %v567 = vld [vmem:[#allocation2 + $0x4d8] sm:$0xff]
    %v568 = vld [vmem:[#allocation2 + $0x4e0] sm:$0xff]
    %v569 = vld [vmem:[#allocation2 + $0x4e8] sm:$0xff]
    %v570 = vld [vmem:[#allocation2 + $0x4f0] sm:$0xff]
    %v571 = vld [vmem:[#allocation2 + $0x4f8] sm:$0xff]
    %v572 = vld [vmem:[#allocation2 + $0x500] sm:$0xff]
    %v573 = vld [vmem:[#allocation2 + $0x508] sm:$0xff]
    %v574 = vld [vmem:[#allocation2 + $0x510] sm:$0xff]
    %v575 = vld [vmem:[#allocation2 + $0x518] sm:$0xff]
    %v576 = vld [vmem:[#allocation2 + $0x520] sm:$0xff]
    %v577 = vld [vmem:[#allocation2 + $0x528] sm:$0xff]
    %v578 = vld [vmem:[#allocation2 + $0x530] sm:$0xff]
    %v579 = vld [vmem:[#allocation2 + $0x538] sm:$0xff]
    %v580 = vld [vmem:[#allocation2 + $0x540] sm:$0xff]
    %v581 = vld [vmem:[#allocation2 + $0x548] sm:$0xff]
    %v582 = vld [vmem:[#allocation2 + $0x550] sm:$0xff]
    %v583 = vld [vmem:[#allocation2 + $0x558] sm:$0xff]
    %v584 = vld [vmem:[#allocation2 + $0x560] sm:$0xff]
    %v585 = vld [vmem:[#allocation2 + $0x568] sm:$0xff]
    %v586 = vld [vmem:[#allocation2 + $0x570] sm:$0xff]
    %v587 = vld [vmem:[#allocation2 + $0x578] sm:$0xff]
    %v588 = vld [vmem:[#allocation2 + $0x580] sm:$0xff]
    %v589 = vld [vmem:[#allocation2 + $0x588] sm:$0xff]
    %v590 = vld [vmem:[#allocation2 + $0x590] sm:$0xff]
    %v591 = vld [vmem:[#allocation2 + $0x598] sm:$0xff]
    %v592 = vld [vmem:[#allocation2 + $0x5a0] sm:$0xff]
    %v593 = vld [vmem:[#allocation2 + $0x5a8] sm:$0xff]
    %v594 = vld [vmem:[#allocation2 + $0x5b0] sm:$0xff]
    %v595 = vld [vmem:[#allocation2 + $0x5b8] sm:$0xff]
    %v596 = vld [vmem:[#allocation2 + $0x5c0] sm:$0xff]
    %v597 = vld [vmem:[#allocation2 + $0x5c8] sm:$0xff]
    %v598 = vld [vmem:[#allocation2 + $0x5d0] sm:$0xff]
    %v599 = vld [vmem:[#allocation2 + $0x5d8] sm:$0xff]
    %v600 = vld [vmem:[#allocation2 + $0x5e0] sm:$0xff]
    %v601 = vld [vmem:[#allocation2 + $0x5e8] sm:$0xff]
    %v602 = vld [vmem:[#allocation2 + $0x5f0] sm:$0xff]
    %v603 = vld [vmem:[#allocation2 + $0x5f8] sm:$0xff]
    %v604 = vld [vmem:[#allocation2 + $0x600] sm:$0xff]
    %v605 = vld [vmem:[#allocation2 + $0x608] sm:$0xff]
    %v606 = vld [vmem:[#allocation2 + $0x610] sm:$0xff]
    %v607 = vld [vmem:[#allocation2 + $0x618] sm:$0xff]
    %v608 = vld [vmem:[#allocation2 + $0x620] sm:$0xff]
    %v609 = vld [vmem:[#allocation2 + $0x628] sm:$0xff]
    %v610 = vld [vmem:[#allocation2 + $0x630] sm:$0xff]
    %v611 = vld [vmem:[#allocation2 + $0x638] sm:$0xff]
    %v612 = vld [vmem:[#allocation2 + $0x640] sm:$0xff]
    %v613 = vld [vmem:[#allocation2 + $0x648] sm:$0xff]
    %v614 = vld [vmem:[#allocation2 + $0x650] sm:$0xff]
    %v615 = vld [vmem:[#allocation2 + $0x658] sm:$0xff]
    %v616 = vld [vmem:[#allocation2 + $0x660] sm:$0xff]
    %v617 = vld [vmem:[#allocation2 + $0x668] sm:$0xff]
    %v618 = vld [vmem:[#allocation2 + $0x670] sm:$0xff]
    %v619 = vld [vmem:[#allocation2 + $0x678] sm:$0xff]
    %v620 = vld [vmem:[#allocation2 + $0x680] sm:$0xff]
    %v621 = vld [vmem:[#allocation2 + $0x688] sm:$0xff]
    %v622 = vld [vmem:[#allocation2 + $0x690] sm:$0xff]
    %v623 = vld [vmem:[#allocation2 + $0x698] sm:$0xff]
    %v624 = vld [vmem:[#allocation2 + $0x6a0] sm:$0xff]
    %v625 = vld [vmem:[#allocation2 + $0x6a8] sm:$0xff]
    %v626 = vld [vmem:[#allocation2 + $0x6b0] sm:$0xff]
    %v627 = vld [vmem:[#allocation2 + $0x6b8] sm:$0xff]
    %v628 = vld [vmem:[#allocation2 + $0x6c0] sm:$0xff]
    %v629 = vld [vmem:[#allocation2 + $0x6c8] sm:$0xff]
    %v630 = vld [vmem:[#allocation2 + $0x6d0] sm:$0xff]
    %v631 = vld [vmem:[#allocation2 + $0x6d8] sm:$0xff]
    %v632 = vld [vmem:[#allocation2 + $0x6e0] sm:$0xff]
    %v633 = vld [vmem:[#allocation2 + $0x6e8] sm:$0xff]
    %v634 = vld [vmem:[#allocation2 + $0x6f0] sm:$0xff]
    %v635 = vld [vmem:[#allocation2 + $0x6f8] sm:$0xff]
    %v636 = vld [vmem:[#allocation2 + $0x700] sm:$0xff]
    %v637 = vld [vmem:[#allocation2 + $0x708] sm:$0xff]
    %v638 = vld [vmem:[#allocation2 + $0x710] sm:$0xff]
    %v639 = vld [vmem:[#allocation2 + $0x718] sm:$0xff]
    %v640 = vld [vmem:[#allocation2 + $0x720] sm:$0xff]
    %v641 = vld [vmem:[#allocation2 + $0x728] sm:$0xff]
    %v642 = vld [vmem:[#allocation2 + $0x730] sm:$0xff]
    %v643 = vld [vmem:[#allocation2 + $0x738] sm:$0xff]
    %v644 = vld [vmem:[#allocation2 + $0x740] sm:$0xff]
    %v645 = vld [vmem:[#allocation2 + $0x748] sm:$0xff]
    %v646 = vld [vmem:[#allocation2 + $0x750] sm:$0xff]
    %v647 = vld [vmem:[#allocation2 + $0x758] sm:$0xff]
    %v648 = vld [vmem:[#allocation2 + $0x760] sm:$0xff]
    %v649 = vld [vmem:[#allocation2 + $0x768] sm:$0xff]
    %v650 = vld [vmem:[#allocation2 + $0x770] sm:$0xff]
    %v651 = vld [vmem:[#allocation2 + $0x778] sm:$0xff]
    %v652 = vld [vmem:[#allocation2 + $0x780] sm:$0xff]
    %v653 = vld [vmem:[#allocation2 + $0x788] sm:$0xff]
    %v654 = vld [vmem:[#allocation2 + $0x790] sm:$0xff]
    %v655 = vld [vmem:[#allocation2 + $0x798] sm:$0xff]
    %v656 = vld [vmem:[#allocation2 + $0x7a0] sm:$0xff]
    %v657 = vld [vmem:[#allocation2 + $0x7a8] sm:$0xff]
    %v658 = vld [vmem:[#allocation2 + $0x7b0] sm:$0xff]
    %v659 = vld [vmem:[#allocation2 + $0x7b8] sm:$0xff]
    %v660 = vld [vmem:[#allocation2 + $0x7c0] sm:$0xff]
    %v661 = vld [vmem:[#allocation2 + $0x7c8] sm:$0xff]
    %v662 = vld [vmem:[#allocation2 + $0x7d0] sm:$0xff]
    %v663 = vld [vmem:[#allocation2 + $0x7d8] sm:$0xff]
    %v664 = vld [vmem:[#allocation2 + $0x7e0] sm:$0xff]
    %v665 = vld [vmem:[#allocation2 + $0x7e8] sm:$0xff]
    %v666 = vld [vmem:[#allocation2 + $0x7f0] sm:$0xff]
    %v667 = vld [vmem:[#allocation2 + $0x7f8] sm:$0xff]
    %v668 = vld [vmem:[%s6] sm:$0xf]
    %v670 = vlaneseq
    %v671 = vshrl.u32 %v670, 7
    %v672 = vsub.s32 0, %v671
    %v673 = vrot.slane %v668, %v672
    %v674 = vlaneseq
    %v675 = vshrl.u32 %v674, 7
    %v676 = vsub.s32 1, %v675
    %v677 = vrot.slane %v668, %v676
    %v678 = vlaneseq
    %v679 = vshrl.u32 %v678, 7
    %v680 = vsub.s32 2, %v679
    %v681 = vrot.slane %v668, %v680
    %v682 = vlaneseq
    %v683 = vshrl.u32 %v682, 7
    %v684 = vsub.s32 3, %v683
    %v685 = vrot.slane %v668, %v684
    %690 = vmatprep.subr.mxu0 %v473
    %691 = vmatpush1.msra.mxu0 %v472
    %692 = vmatprep.subr.mxu0 %v469
    %693 = vmatpush1.msra.mxu0 %v468
    %694 = vmatprep.subr.mxu0 %v465
    %695 = vmatpush1.msra.mxu0 %v464
    %696 = vmatprep.subr.mxu0 %v461
    %697 = vmatpush1.msra.mxu0 %v460
    %698 = vmatprep.subr.mxu0 %v457
    %699 = vmatpush1.msra.mxu0 %v456
    %700 = vmatprep.subr.mxu0 %v453
    %701 = vmatpush1.msra.mxu0 %v452
    %702 = vmatprep.subr.mxu0 %v449
    %703 = vmatpush1.msra.mxu0 %v448
    %704 = vmatprep.subr.mxu0 %v445
    %705 = vmatpush1.msra.mxu0 %v444
    %706 = vmatprep.subr.mxu0 %v441
    %707 = vmatpush1.msra.mxu0 %v440
    %708 = vmatprep.subr.mxu0 %v437
    %709 = vmatpush1.msra.mxu0 %v436
    %710 = vmatprep.subr.mxu0 %v433
    %711 = vmatpush1.msra.mxu0 %v432
    %712 = vmatprep.subr.mxu0 %v429
    %713 = vmatpush1.msra.mxu0 %v428
    %714 = vmatprep.subr.mxu0 %v425
    %715 = vmatpush1.msra.mxu0 %v424
    %716 = vmatprep.subr.mxu0 %v421
    %717 = vmatpush1.msra.mxu0 %v420
    %718 = vmatprep.subr.mxu0 %v417
    %719 = vmatpush1.msra.mxu0 %v416
    %720 = vmatprep.subr.mxu0 %v413
    %721 = vmatpush1.msra.mxu0 %v412
    %722 = vmatprep.subr.mxu0 %v537
    %723 = vmatpush2.msra.mxu0 %v536
    %724 = vmatprep.subr.mxu0 %v533
    %725 = vmatpush2.msra.mxu0 %v532
    %726 = vmatprep.subr.mxu0 %v529
    %727 = vmatpush2.msra.mxu0 %v528
    %728 = vmatprep.subr.mxu0 %v525
    %729 = vmatpush2.msra.mxu0 %v524
    %730 = vmatprep.subr.mxu0 %v521
    %731 = vmatpush2.msra.mxu0 %v520
    %732 = vmatprep.subr.mxu0 %v517
    %733 = vmatpush2.msra.mxu0 %v516
    %734 = vmatprep.subr.mxu0 %v513
    %735 = vmatpush2.msra.mxu0 %v512
    %736 = vmatprep.subr.mxu0 %v509
    %737 = vmatpush2.msra.mxu0 %v508
    %738 = vmatprep.subr.mxu0 %v505
    %739 = vmatpush2.msra.mxu0 %v504
    %740 = vmatprep.subr.mxu0 %v501
    %741 = vmatpush2.msra.mxu0 %v500
    %742 = vmatprep.subr.mxu0 %v497
    %743 = vmatpush2.msra.mxu0 %v496
    %744 = vmatprep.subr.mxu0 %v493
    %745 = vmatpush2.msra.mxu0 %v492
    %746 = vmatprep.subr.mxu0 %v489
    %747 = vmatpush2.msra.mxu0 %v488
    %748 = vmatprep.subr.mxu0 %v485
    %749 = vmatpush2.msra.mxu0 %v484
    %750 = vmatprep.subr.mxu0 %v481
    %751 = vmatpush2.msra.mxu0 %v480
    %752 = vmatprep.subr.mxu0 %v477
    %753 = vmatpush2.msra.mxu0 %v476
    %754 = vmatprep.mubr.f32.mxu0 %v409
    %755 = vmatmul.mubr.f32.gmra.mxu0 %v408
    %v756 = vpop.f32.mrf.mxu0
    %v757 = vadd.f32 %v673, %v756
    %v758 = vpop.f32.mrf.mxu0
    %v759 = vadd.f32 %v677, %v758
    %760 = vdwg.mxu0
    %761 = vmatprep.subr.mxu0 %v601
    %762 = vmatpush1.msra.mxu0 %v600
    %763 = vmatprep.subr.mxu0 %v597
    %764 = vmatpush1.msra.mxu0 %v596
    %765 = vmatprep.subr.mxu0 %v593
    %766 = vmatpush1.msra.mxu0 %v592
    %767 = vmatprep.subr.mxu0 %v589
    %768 = vmatpush1.msra.mxu0 %v588
    %769 = vmatprep.subr.mxu0 %v585
    %770 = vmatpush1.msra.mxu0 %v584
    %771 = vmatprep.subr.mxu0 %v581
    %772 = vmatpush1.msra.mxu0 %v580
    %773 = vmatprep.subr.mxu0 %v577
    %774 = vmatpush1.msra.mxu0 %v576
    %775 = vmatprep.subr.mxu0 %v573
    %776 = vmatpush1.msra.mxu0 %v572
    %777 = vmatprep.subr.mxu0 %v569
    %778 = vmatpush1.msra.mxu0 %v568
    %779 = vmatprep.subr.mxu0 %v565
    %780 = vmatpush1.msra.mxu0 %v564
    %781 = vmatprep.subr.mxu0 %v561
    %782 = vmatpush1.msra.mxu0 %v560
    %783 = vmatprep.subr.mxu0 %v557
    %784 = vmatpush1.msra.mxu0 %v556
    %785 = vmatprep.subr.mxu0 %v553
    %786 = vmatpush1.msra.mxu0 %v552
    %787 = vmatprep.subr.mxu0 %v549
    %788 = vmatpush1.msra.mxu0 %v548
    %789 = vmatprep.subr.mxu0 %v545
    %790 = vmatpush1.msra.mxu0 %v544
    %791 = vmatprep.subr.mxu0 %v541
    %792 = vmatpush1.msra.mxu0 %v540
    %793 = vmatprep.subr.mxu0 %v665
    %794 = vmatpush2.msra.mxu0 %v664
    %795 = vmatprep.subr.mxu0 %v661
    %796 = vmatpush2.msra.mxu0 %v660
    %797 = vmatprep.subr.mxu0 %v657
    %798 = vmatpush2.msra.mxu0 %v656
    %799 = vmatprep.subr.mxu0 %v653
    %800 = vmatpush2.msra.mxu0 %v652
    %801 = vmatprep.subr.mxu0 %v649
    %802 = vmatpush2.msra.mxu0 %v648
    %803 = vmatprep.subr.mxu0 %v645
    %804 = vmatpush2.msra.mxu0 %v644
    %805 = vmatprep.subr.mxu0 %v641
    %806 = vmatpush2.msra.mxu0 %v640
    %807 = vmatprep.subr.mxu0 %v637
    %808 = vmatpush2.msra.mxu0 %v636
    %809 = vmatprep.subr.mxu0 %v633
    %810 = vmatpush2.msra.mxu0 %v632
    %811 = vmatprep.subr.mxu0 %v629
    %812 = vmatpush2.msra.mxu0 %v628
    %813 = vmatprep.subr.mxu0 %v625
    %814 = vmatpush2.msra.mxu0 %v624
    %815 = vmatprep.subr.mxu0 %v621
    %816 = vmatpush2.msra.mxu0 %v620
    %817 = vmatprep.subr.mxu0 %v617
    %818 = vmatpush2.msra.mxu0 %v616
    %819 = vmatprep.subr.mxu0 %v613
    %820 = vmatpush2.msra.mxu0 %v612
    %821 = vmatprep.subr.mxu0 %v609
    %822 = vmatpush2.msra.mxu0 %v608
    %823 = vmatprep.subr.mxu0 %v605
    %824 = vmatpush2.msra.mxu0 %v604
    %825 = vmatprep.mubr.f32.mxu0 %v411
    %826 = vmatmul.mubr.f32.gmra.mxu0 %v410
    %v827 = vpop.f32.mrf.mxu0
    %v828 = vadd.f32 %v757, %v827
    %v829 = vpop.f32.mrf.mxu0
    %v830 = vadd.f32 %v759, %v829
    %831 = vdwg.mxu0
    %832 = vmatprep.subr.mxu0 %v475
    %833 = vmatpush1.msra.mxu0 %v474
    %834 = vmatprep.subr.mxu0 %v471
    %835 = vmatpush1.msra.mxu0 %v470
    %836 = vmatprep.subr.mxu0 %v467
    %837 = vmatpush1.msra.mxu0 %v466
    %838 = vmatprep.subr.mxu0 %v463
    %839 = vmatpush1.msra.mxu0 %v462
    %840 = vmatprep.subr.mxu0 %v459
    %841 = vmatpush1.msra.mxu0 %v458
    %842 = vmatprep.subr.mxu0 %v455
    %843 = vmatpush1.msra.mxu0 %v454
    %844 = vmatprep.subr.mxu0 %v451
    %845 = vmatpush1.msra.mxu0 %v450
    %846 = vmatprep.subr.mxu0 %v447
    %847 = vmatpush1.msra.mxu0 %v446
    %848 = vmatprep.subr.mxu0 %v443
    %849 = vmatpush1.msra.mxu0 %v442
    %850 = vmatprep.subr.mxu0 %v439
    %851 = vmatpush1.msra.mxu0 %v438
    %852 = vmatprep.subr.mxu0 %v435
    %853 = vmatpush1.msra.mxu0 %v434
    %854 = vmatprep.subr.mxu0 %v431
    %855 = vmatpush1.msra.mxu0 %v430
    %856 = vmatprep.subr.mxu0 %v427
    %857 = vmatpush1.msra.mxu0 %v426
    %858 = vmatprep.subr.mxu0 %v423
    %859 = vmatpush1.msra.mxu0 %v422
    %860 = vmatprep.subr.mxu0 %v419
    %861 = vmatpush1.msra.mxu0 %v418
    %862 = vmatprep.subr.mxu0 %v415
    %863 = vmatpush1.msra.mxu0 %v414
    %864 = vmatprep.subr.mxu0 %v539
    %865 = vmatpush2.msra.mxu0 %v538
    %866 = vmatprep.subr.mxu0 %v535
    %867 = vmatpush2.msra.mxu0 %v534
    %868 = vmatprep.subr.mxu0 %v531
    %869 = vmatpush2.msra.mxu0 %v530
    %870 = vmatprep.subr.mxu0 %v527
    %871 = vmatpush2.msra.mxu0 %v526
    %872 = vmatprep.subr.mxu0 %v523
    %873 = vmatpush2.msra.mxu0 %v522
    %874 = vmatprep.subr.mxu0 %v519
    %875 = vmatpush2.msra.mxu0 %v518
    %876 = vmatprep.subr.mxu0 %v515
    %877 = vmatpush2.msra.mxu0 %v514
    %878 = vmatprep.subr.mxu0 %v511
    %879 = vmatpush2.msra.mxu0 %v510
    %880 = vmatprep.subr.mxu0 %v507
    %881 = vmatpush2.msra.mxu0 %v506
    %882 = vmatprep.subr.mxu0 %v503
    %883 = vmatpush2.msra.mxu0 %v502
    %884 = vmatprep.subr.mxu0 %v499
    %885 = vmatpush2.msra.mxu0 %v498
    %886 = vmatprep.subr.mxu0 %v495
    %887 = vmatpush2.msra.mxu0 %v494
    %888 = vmatprep.subr.mxu0 %v491
    %889 = vmatpush2.msra.mxu0 %v490
    %890 = vmatprep.subr.mxu0 %v487
    %891 = vmatpush2.msra.mxu0 %v486
    %892 = vmatprep.subr.mxu0 %v483
    %893 = vmatpush2.msra.mxu0 %v482
    %894 = vmatprep.subr.mxu0 %v479
    %895 = vmatpush2.msra.mxu0 %v478
    %896 = vmatprep.mubr.f32.mxu0 %v409
    %897 = vmatmul.mubr.f32.gmra.mxu0 %v408
    %v898 = vpop.f32.mrf.mxu0
    %v899 = vadd.f32 %v681, %v898
    %v900 = vpop.f32.mrf.mxu0
    %v901 = vadd.f32 %v685, %v900
    %902 = vdwg.mxu0
    %903 = vmatprep.subr.mxu0 %v603
    %904 = vmatpush1.msra.mxu0 %v602
    %905 = vmatprep.subr.mxu0 %v599
    %906 = vmatpush1.msra.mxu0 %v598
    %907 = vmatprep.subr.mxu0 %v595
    %908 = vmatpush1.msra.mxu0 %v594
    %909 = vmatprep.subr.mxu0 %v591
    %910 = vmatpush1.msra.mxu0 %v590
    %911 = vmatprep.subr.mxu0 %v587
    %912 = vmatpush1.msra.mxu0 %v586
    %913 = vmatprep.subr.mxu0 %v583
    %914 = vmatpush1.msra.mxu0 %v582
    %915 = vmatprep.subr.mxu0 %v579
    %916 = vmatpush1.msra.mxu0 %v578
    %917 = vmatprep.subr.mxu0 %v575
    %918 = vmatpush1.msra.mxu0 %v574
    %919 = vmatprep.subr.mxu0 %v571
    %920 = vmatpush1.msra.mxu0 %v570
    %921 = vmatprep.subr.mxu0 %v567
    %922 = vmatpush1.msra.mxu0 %v566
    %923 = vmatprep.subr.mxu0 %v563
    %924 = vmatpush1.msra.mxu0 %v562
    %925 = vmatprep.subr.mxu0 %v559
    %926 = vmatpush1.msra.mxu0 %v558
    %927 = vmatprep.subr.mxu0 %v555
    %928 = vmatpush1.msra.mxu0 %v554
    %929 = vmatprep.subr.mxu0 %v551
    %930 = vmatpush1.msra.mxu0 %v550
    %931 = vmatprep.subr.mxu0 %v547
    %932 = vmatpush1.msra.mxu0 %v546
    %933 = vmatprep.subr.mxu0 %v543
    %934 = vmatpush1.msra.mxu0 %v542
    %935 = vmatprep.subr.mxu0 %v667
    %936 = vmatpush2.msra.mxu0 %v666
    %937 = vmatprep.subr.mxu0 %v663
    %938 = vmatpush2.msra.mxu0 %v662
    %939 = vmatprep.subr.mxu0 %v659
    %940 = vmatpush2.msra.mxu0 %v658
    %941 = vmatprep.subr.mxu0 %v655
    %942 = vmatpush2.msra.mxu0 %v654
    %943 = vmatprep.subr.mxu0 %v651
    %944 = vmatpush2.msra.mxu0 %v650
    %945 = vmatprep.subr.mxu0 %v647
    %946 = vmatpush2.msra.mxu0 %v646
    %947 = vmatprep.subr.mxu0 %v643
    %948 = vmatpush2.msra.mxu0 %v642
    %949 = vmatprep.subr.mxu0 %v639
    %950 = vmatpush2.msra.mxu0 %v638
    %951 = vmatprep.subr.mxu0 %v635
    %952 = vmatpush2.msra.mxu0 %v634
    %953 = vmatprep.subr.mxu0 %v631
    %954 = vmatpush2.msra.mxu0 %v630
    %955 = vmatprep.subr.mxu0 %v627
    %956 = vmatpush2.msra.mxu0 %v626
    %957 = vmatprep.subr.mxu0 %v623
    %958 = vmatpush2.msra.mxu0 %v622
    %959 = vmatprep.subr.mxu0 %v619
    %960 = vmatpush2.msra.mxu0 %v618
    %961 = vmatprep.subr.mxu0 %v615
    %962 = vmatpush2.msra.mxu0 %v614
    %963 = vmatprep.subr.mxu0 %v611
    %964 = vmatpush2.msra.mxu0 %v610
    %965 = vmatprep.subr.mxu0 %v607
    %966 = vmatpush2.msra.mxu0 %v606
    %967 = vmatprep.mubr.f32.mxu0 %v411
    %968 = vmatmul.mubr.f32.gmra.mxu0 %v410
    %v969 = vpop.f32.mrf.mxu0
    %v970 = vadd.f32 %v899, %v969
    %v971 = vpop.f32.mrf.mxu0
    %v972 = vadd.f32 %v901, %v971
    %973 = vdwg.mxu0
    %v974 = vmax.f32 %v828, 0.0
    %v975 = vmax.f32 %v830, 0.0
    %v976 = vmax.f32 %v970, 0.0
    %v977 = vmax.f32 %v972, 0.0
    %v978 = vld [vmem:[%s7] sm:$0xff]
    %v979 = vld [vmem:[%s7 + $0x8] sm:$0xff]
    %v980 = vld [vmem:[%s7 + $0x10] sm:$0xff]
    %v981 = vld [vmem:[%s7 + $0x18] sm:$0xff]
    %v982 = vld [vmem:[%s7 + $0x20] sm:$0xff]
    %v983 = vld [vmem:[%s7 + $0x28] sm:$0xff]
    %v984 = vld [vmem:[%s7 + $0x30] sm:$0xff]
    %v985 = vld [vmem:[%s7 + $0x38] sm:$0xff]
    %v986 = vld [vmem:[%s7 + $0x40] sm:$0xff]
    %v987 = vld [vmem:[%s7 + $0x48] sm:$0xff]
    %v988 = vld [vmem:[%s7 + $0x50] sm:$0xff]
    %v989 = vld [vmem:[%s7 + $0x58] sm:$0xff]
    %v990 = vld [vmem:[%s7 + $0x60] sm:$0xff]
    %v991 = vld [vmem:[%s7 + $0x68] sm:$0xff]
    %v992 = vld [vmem:[%s7 + $0x70] sm:$0xff]
    %v993 = vld [vmem:[%s7 + $0x78] sm:$0xff]
    %v994 = vld [vmem:[%s7 + $0x80] sm:$0xff]
    %v995 = vld [vmem:[%s7 + $0x88] sm:$0xff]
    %v996 = vld [vmem:[%s7 + $0x90] sm:$0xff]
    %v997 = vld [vmem:[%s7 + $0x98] sm:$0xff]
    %v998 = vld [vmem:[%s7 + $0xa0] sm:$0xff]
    %v999 = vld [vmem:[%s7 + $0xa8] sm:$0xff]
    %v1000 = vld [vmem:[%s7 + $0xb0] sm:$0xff]
    %v1001 = vld [vmem:[%s7 + $0xb8] sm:$0xff]
    %v1002 = vld [vmem:[%s7 + $0xc0] sm:$0xff]
    %v1003 = vld [vmem:[%s7 + $0xc8] sm:$0xff]
    %v1004 = vld [vmem:[%s7 + $0xd0] sm:$0xff]
    %v1005 = vld [vmem:[%s7 + $0xd8] sm:$0xff]
    %v1006 = vld [vmem:[%s7 + $0xe0] sm:$0xff]
    %v1007 = vld [vmem:[%s7 + $0xe8] sm:$0xff]
    %v1008 = vld [vmem:[%s7 + $0xf0] sm:$0xff]
    %v1009 = vld [vmem:[%s7 + $0xf8] sm:$0xff]
    %v1010 = vld [vmem:[%s7 + $0x100] sm:$0xff]
    %v1011 = vld [vmem:[%s7 + $0x108] sm:$0xff]
    %v1012 = vld [vmem:[%s7 + $0x110] sm:$0xff]
    %v1013 = vld [vmem:[%s7 + $0x118] sm:$0xff]
    %v1014 = vld [vmem:[%s7 + $0x120] sm:$0xff]
    %v1015 = vld [vmem:[%s7 + $0x128] sm:$0xff]
    %v1016 = vld [vmem:[%s7 + $0x130] sm:$0xff]
    %v1017 = vld [vmem:[%s7 + $0x138] sm:$0xff]
    %v1018 = vld [vmem:[%s7 + $0x140] sm:$0xff]
    %v1019 = vld [vmem:[%s7 + $0x148] sm:$0xff]
    %v1020 = vld [vmem:[%s7 + $0x150] sm:$0xff]
    %v1021 = vld [vmem:[%s7 + $0x158] sm:$0xff]
    %v1022 = vld [vmem:[%s7 + $0x160] sm:$0xff]
    %v1023 = vld [vmem:[%s7 + $0x168] sm:$0xff]
    %v1024 = vld [vmem:[%s7 + $0x170] sm:$0xff]
    %v1025 = vld [vmem:[%s7 + $0x178] sm:$0xff]
    %v1026 = vld [vmem:[%s7 + $0x180] sm:$0xff]
    %v1027 = vld [vmem:[%s7 + $0x188] sm:$0xff]
    %v1028 = vld [vmem:[%s7 + $0x190] sm:$0xff]
    %v1029 = vld [vmem:[%s7 + $0x198] sm:$0xff]
    %v1030 = vld [vmem:[%s7 + $0x1a0] sm:$0xff]
    %v1031 = vld [vmem:[%s7 + $0x1a8] sm:$0xff]
    %v1032 = vld [vmem:[%s7 + $0x1b0] sm:$0xff]
    %v1033 = vld [vmem:[%s7 + $0x1b8] sm:$0xff]
    %v1034 = vld [vmem:[%s7 + $0x1c0] sm:$0xff]
    %v1035 = vld [vmem:[%s7 + $0x1c8] sm:$0xff]
    %v1036 = vld [vmem:[%s7 + $0x1d0] sm:$0xff]
    %v1037 = vld [vmem:[%s7 + $0x1d8] sm:$0xff]
    %v1038 = vld [vmem:[%s7 + $0x1e0] sm:$0xff]
    %v1039 = vld [vmem:[%s7 + $0x1e8] sm:$0xff]
    %v1040 = vld [vmem:[%s7 + $0x1f0] sm:$0xff]
    %v1041 = vld [vmem:[%s7 + $0x1f8] sm:$0xff]
    %v1042 = vld [vmem:[%s8] sm:$0x1]
    %v1044 = vlaneseq
    %v1045 = vshrl.u32 %v1044, 7
    %v1046 = vsub.s32 0, %v1045
    %v1047 = vrot.slane %v1042, %v1046
    %1049 = vmatprep.subr.mxu0 0.0
    %1050 = vmatpush1.msra.mxu0 %v993
    %1051 = vmatprep.subr.mxu0 0.0
    %1052 = vmatpush1.msra.mxu0 %v992
    %1053 = vmatprep.subr.mxu0 0.0
    %1054 = vmatpush1.msra.mxu0 %v991
    %1055 = vmatprep.subr.mxu0 0.0
    %1056 = vmatpush1.msra.mxu0 %v990
    %1057 = vmatprep.subr.mxu0 0.0
    %1058 = vmatpush1.msra.mxu0 %v989
    %1059 = vmatprep.subr.mxu0 0.0
    %1060 = vmatpush1.msra.mxu0 %v988
    %1061 = vmatprep.subr.mxu0 0.0
    %1062 = vmatpush1.msra.mxu0 %v987
    %1063 = vmatprep.subr.mxu0 0.0
    %1064 = vmatpush1.msra.mxu0 %v986
    %1065 = vmatprep.subr.mxu0 0.0
    %1066 = vmatpush1.msra.mxu0 %v985
    %1067 = vmatprep.subr.mxu0 0.0
    %1068 = vmatpush1.msra.mxu0 %v984
    %1069 = vmatprep.subr.mxu0 0.0
    %1070 = vmatpush1.msra.mxu0 %v983
    %1071 = vmatprep.subr.mxu0 0.0
    %1072 = vmatpush1.msra.mxu0 %v982
    %1073 = vmatprep.subr.mxu0 0.0
    %1074 = vmatpush1.msra.mxu0 %v981
    %1075 = vmatprep.subr.mxu0 0.0
    %1076 = vmatpush1.msra.mxu0 %v980
    %1077 = vmatprep.subr.mxu0 0.0
    %1078 = vmatpush1.msra.mxu0 %v979
    %1079 = vmatprep.subr.mxu0 0.0
    %1080 = vmatpush1.msra.mxu0 %v978
    %1081 = vmatprep.subr.mxu0 0.0
    %1082 = vmatpush2.msra.mxu0 %v1009
    %1083 = vmatprep.subr.mxu0 0.0
    %1084 = vmatpush2.msra.mxu0 %v1008
    %1085 = vmatprep.subr.mxu0 0.0
    %1086 = vmatpush2.msra.mxu0 %v1007
    %1087 = vmatprep.subr.mxu0 0.0
    %1088 = vmatpush2.msra.mxu0 %v1006
    %1089 = vmatprep.subr.mxu0 0.0
    %1090 = vmatpush2.msra.mxu0 %v1005
    %1091 = vmatprep.subr.mxu0 0.0
    %1092 = vmatpush2.msra.mxu0 %v1004
    %1093 = vmatprep.subr.mxu0 0.0
    %1094 = vmatpush2.msra.mxu0 %v1003
    %1095 = vmatprep.subr.mxu0 0.0
    %1096 = vmatpush2.msra.mxu0 %v1002
    %1097 = vmatprep.subr.mxu0 0.0
    %1098 = vmatpush2.msra.mxu0 %v1001
    %1099 = vmatprep.subr.mxu0 0.0
    %1100 = vmatpush2.msra.mxu0 %v1000
    %1101 = vmatprep.subr.mxu0 0.0
    %1102 = vmatpush2.msra.mxu0 %v999
    %1103 = vmatprep.subr.mxu0 0.0
    %1104 = vmatpush2.msra.mxu0 %v998
    %1105 = vmatprep.subr.mxu0 0.0
    %1106 = vmatpush2.msra.mxu0 %v997
    %1107 = vmatprep.subr.mxu0 0.0
    %1108 = vmatpush2.msra.mxu0 %v996
    %1109 = vmatprep.subr.mxu0 0.0
    %1110 = vmatpush2.msra.mxu0 %v995
    %1111 = vmatprep.subr.mxu0 0.0
    %1112 = vmatpush2.msra.mxu0 %v994
    %1113 = vmatprep.mubr.f32.mxu0 %v975
    %1114 = vmatmul.mubr.f32.gmra.mxu0 %v974
    %v1115 = vpop.f32.mrf.mxu0
    %v1116 = vadd.f32 %v1047, %v1115
    %v1117 = vpop.f32.mrf.mxu0
    %1118 = vdwg.mxu0
    %1119 = vmatprep.subr.mxu0 0.0
    %1120 = vmatpush1.msra.mxu0 %v1025
    %1121 = vmatprep.subr.mxu0 0.0
    %1122 = vmatpush1.msra.mxu0 %v1024
    %1123 = vmatprep.subr.mxu0 0.0
    %1124 = vmatpush1.msra.mxu0 %v1023
    %1125 = vmatprep.subr.mxu0 0.0
    %1126 = vmatpush1.msra.mxu0 %v1022
    %1127 = vmatprep.subr.mxu0 0.0
    %1128 = vmatpush1.msra.mxu0 %v1021
    %1129 = vmatprep.subr.mxu0 0.0
    %1130 = vmatpush1.msra.mxu0 %v1020
    %1131 = vmatprep.subr.mxu0 0.0
    %1132 = vmatpush1.msra.mxu0 %v1019
    %1133 = vmatprep.subr.mxu0 0.0
    %1134 = vmatpush1.msra.mxu0 %v1018
    %1135 = vmatprep.subr.mxu0 0.0
    %1136 = vmatpush1.msra.mxu0 %v1017
    %1137 = vmatprep.subr.mxu0 0.0
    %1138 = vmatpush1.msra.mxu0 %v1016
    %1139 = vmatprep.subr.mxu0 0.0
    %1140 = vmatpush1.msra.mxu0 %v1015
    %1141 = vmatprep.subr.mxu0 0.0
    %1142 = vmatpush1.msra.mxu0 %v1014
    %1143 = vmatprep.subr.mxu0 0.0
    %1144 = vmatpush1.msra.mxu0 %v1013
    %1145 = vmatprep.subr.mxu0 0.0
    %1146 = vmatpush1.msra.mxu0 %v1012
    %1147 = vmatprep.subr.mxu0 0.0
    %1148 = vmatpush1.msra.mxu0 %v1011
    %1149 = vmatprep.subr.mxu0 0.0
    %1150 = vmatpush1.msra.mxu0 %v1010
    %1151 = vmatprep.subr.mxu0 0.0
    %1152 = vmatpush2.msra.mxu0 %v1041
    %1153 = vmatprep.subr.mxu0 0.0
    %1154 = vmatpush2.msra.mxu0 %v1040
    %1155 = vmatprep.subr.mxu0 0.0
    %1156 = vmatpush2.msra.mxu0 %v1039
    %1157 = vmatprep.subr.mxu0 0.0
    %1158 = vmatpush2.msra.mxu0 %v1038
    %1159 = vmatprep.subr.mxu0 0.0
    %1160 = vmatpush2.msra.mxu0 %v1037
    %1161 = vmatprep.subr.mxu0 0.0
    %1162 = vmatpush2.msra.mxu0 %v1036
    %1163 = vmatprep.subr.mxu0 0.0
    %1164 = vmatpush2.msra.mxu0 %v1035
    %1165 = vmatprep.subr.mxu0 0.0
    %1166 = vmatpush2.msra.mxu0 %v1034
    %1167 = vmatprep.subr.mxu0 0.0
    %1168 = vmatpush2.msra.mxu0 %v1033
    %1169 = vmatprep.subr.mxu0 0.0
    %1170 = vmatpush2.msra.mxu0 %v1032
    %1171 = vmatprep.subr.mxu0 0.0
    %1172 = vmatpush2.msra.mxu0 %v1031
    %1173 = vmatprep.subr.mxu0 0.0
    %1174 = vmatpush2.msra.mxu0 %v1030
    %1175 = vmatprep.subr.mxu0 0.0
    %1176 = vmatpush2.msra.mxu0 %v1029
    %1177 = vmatprep.subr.mxu0 0.0
    %1178 = vmatpush2.msra.mxu0 %v1028
    %1179 = vmatprep.subr.mxu0 0.0
    %1180 = vmatpush2.msra.mxu0 %v1027
    %1181 = vmatprep.subr.mxu0 0.0
    %1182 = vmatpush2.msra.mxu0 %v1026
    %1183 = vmatprep.mubr.f32.mxu0 %v977
    %1184 = vmatmul.mubr.f32.gmra.mxu0 %v976
    %v1185 = vpop.f32.mrf.mxu0
    %v1186 = vadd.f32 %v1116, %v1185
    %v1187 = vpop.f32.mrf.mxu0
    %1188 = vdwg.mxu0
    %vm1189 = vcmask 15360
    %1190 = vst.msk [vmem:[%s9] sm:$0xff] %vm1189, %v1186
    // Predicated region
    $region42: #{tpu_custom_call.1} parent=1 // pred_check
      _
    $region43: #{tpu_custom_call.1} parent=1 // pred_check_branch
      %1192 = sbr.rel (0) target = $region45
    $region44: #{tpu_custom_call.1} parent=1 // pred_region
      _
    $region45: #{tpu_custom_call.1} parent=1 // pred_fallthru
      _
    // Predicated region
    $region46: #{tpu_custom_call.1} parent=1 // pred_check
      _
    $region47: #{tpu_custom_call.1} parent=1 // pred_check_branch
      %1194 = sbr.rel (0) target = $region49
    $region48: #{tpu_custom_call.1} parent=1 // pred_region
      _
    $region49: #{tpu_custom_call.1} parent=1 // pred_fallthru
      _
    %1195 = vsyncpa [#allocation3], 1

</llo_original>
